<compile_context>
chip_gen: v7x
topology: tpu7x:2x2x1
jax: 0.10.0
libtpu: 0.0.40
codegen_flags: <defaults>
</compile_context>

<pallas_src>
import functools

import jax
import jax.numpy as jnp
from jax import lax
from jax.experimental import pallas as pl
from jax.experimental.pallas import tpu as pltpu


_LANE = 128
_SUBLANE = 8


def _round_up(x, m):
    return -(-x // m) * m


# --------------------------------------------------------------------------
# Kernel 1: streamed spatial sum.  x block [B*C, thw] -> per-split raw sums.
# --------------------------------------------------------------------------
def _spatial_sum_kernel(hw, thw, x_ref, out_ref):
    s = pl.program_id(0)             # split (parallel across TensorCores)
    t = pl.program_id(1)             # streaming step (arbitrary / accumulating)
    n_split = pl.num_programs(0)
    n_steps = pl.num_programs(1)

    # Output block index depends only on s -> resident accumulator across t.
    @pl.when(t == 0)
    def _():
        out_ref[...] = jnp.zeros_like(out_ref)

    x = x_ref[...].astype(jnp.float32)                 # [BC, thw]

    rem = hw % thw                                     # static (trace-time)
    if rem != 0:
        # Only the very last tile of the whole image overhangs H*W; gate the
        # mask on it so steady-state tiles pay zero VPU overhead.
        is_tail = jnp.logical_and(s == n_split - 1, t == n_steps - 1)

        @pl.when(jnp.logical_not(is_tail))
        def _():
            out_ref[...] += jnp.sum(x, axis=-1, keepdims=True)

        @pl.when(is_tail)
        def _():
            col = lax.broadcasted_iota(jnp.int32, x.shape, 1)
            xm = jnp.where(col < rem, x, 0.0)
            out_ref[...] += jnp.sum(xm, axis=-1, keepdims=True)
    else:
        out_ref[...] += jnp.sum(x, axis=-1, keepdims=True)


# --------------------------------------------------------------------------
# Kernel 2: combine partial sums + mean + Linear + BN + ReLU + heads + softmax.
# --------------------------------------------------------------------------
def _selector_epilogue_kernel(inv_hw, eps,
                              p_ref, w1_ref, b1_ref, gamma_ref, beta_ref,
                              wh_ref, bh_ref, out_ref):
    # p_ref: [n_split, B, C] raw spatial sums -> combine splits + true mean.
    vec = jnp.sum(p_ref[...], axis=0) * inv_hw                      # [B, C]

    o1 = jnp.dot(vec, w1_ref[...], preferred_element_type=jnp.float32) + b1_ref[...]
    mu = jnp.mean(o1, axis=0, keepdims=True)
    var = jnp.mean((o1 - mu) ** 2, axis=0, keepdims=True)           # biased, BN train mode
    o1 = (o1 - mu) * lax.rsqrt(var + eps) * gamma_ref[...] + beta_ref[...]
    o1 = jnp.maximum(o1, 0.0)

    # Fused selector heads: wh = [wa | wb]  =>  logits == cat([a, b], dim=1).
    logits = jnp.dot(o1, wh_ref[...], preferred_element_type=jnp.float32) + bh_ref[...]
    m = jnp.max(logits, axis=1, keepdims=True)
    e = jnp.exp(logits - m)
    denom = jnp.sum(e, axis=1, keepdims=True)
    inv = pl.reciprocal(denom, approx=True)                         # EUP slot
    inv = inv * (2.0 - denom * inv)                                 # one Newton step
    out_ref[...] = (e * inv)[:, 0:2]                                # (v[:,0], v[:,1])


# --------------------------------------------------------------------------
# Tiling / VMEM budget (generation-aware).
# --------------------------------------------------------------------------
def _choose_tiling(hw, bc, elem_bytes, target_tile_bytes):
    # Sublane packing per dtype: 4B -> 8 rows, 2B -> 16, 1B -> 32.
    sub = max(_SUBLANE, (4 // max(elem_bytes, 1)) * _SUBLANE)
    bc_pad = _round_up(bc, sub)
    row_bytes = bc_pad * elem_bytes

    try:
        vmem_cap = int(pltpu.get_tpu_info().vmem_capacity_bytes)
    except Exception:  # no TPU info available: assume the tightest (v7x) budget
        vmem_cap = 64 << 20
    budget = (vmem_cap * 3) // 4            # leave compiler/internal headroom

    # Double-buffered output accumulator blocks + misc margin.
    headroom = 4 * bc_pad * _LANE * 4 + (2 << 20)

    if target_tile_bytes is None:
        target_tile_bytes = (16 << 20) if vmem_cap <= (64 << 20) else (32 << 20)
    max_tile_bytes = max(row_bytes * _LANE, (budget - headroom) // 2)
    target_tile_bytes = min(target_tile_bytes, max_tile_bytes)

    max_lanes = max(_LANE, (target_tile_bytes // row_bytes) // _LANE * _LANE)

    if hw <= max_lanes:
        thw, n_tiles, n_split = hw, 1, 1
    else:
        thw = max_lanes
        n_tiles = -(-hw // thw)
        n_split = 1
        if n_tiles % 2 == 0:
            n_split = 2
        else:
            # Try shrinking the tile slightly so the tile count becomes even
            # (enables the 2-TensorCore split on v7x without fully-OOB tiles).
            alt = _round_up(-(-hw // (n_tiles + 1)), _LANE)
            if alt >= _LANE and (-(-hw // alt)) % 2 == 0:
                thw = alt
                n_tiles = -(-hw // thw)
                n_split = 2
    n_steps = n_tiles // n_split

    tile_vmem = row_bytes * _round_up(thw, _LANE)
    vmem_limit = int(max(2 * tile_vmem + headroom, 16 << 20))
    return thw, n_split, n_steps, vmem_limit


# --------------------------------------------------------------------------
# Wrapper.
# --------------------------------------------------------------------------
def size_selector_forward(x, params, out_channels, eps=1e-5, target_tile_bytes=None):
    """x: [B, C, H, W] (f32 or bf16, NCHW). Returns (a, b), each [B, 1, 1, 1] f32."""
    del out_channels  # columns 0/1 of the softmax are taken regardless of out_channels
    B, C, H, W = x.shape
    HW = H * W
    BC = B * C
    x2 = x.reshape(BC, HW)                  # free relabel; dense sublane packing

    # Fused head weights/biases: [I, 2*out] / [1, 2*out].
    wh = jnp.concatenate([params["wa"], params["wb"]], axis=1)
    bh = jnp.concatenate([params["ba"], params["bb"]], axis=1)

    elem_bytes = jnp.dtype(x.dtype).itemsize
    thw, n_split, n_steps, vmem_limit = _choose_tiling(HW, BC, elem_bytes,
                                                       target_tile_bytes)

    cost = pl.CostEstimate(
        flops=int(2 * BC * HW),
        transcendentals=0,
        bytes_accessed=int(BC * HW * elem_bytes + BC * n_split * _LANE * 4))

    # ---- kernel 1: streamed spatial sums, split across TensorCores ----
    stream_out = pl.pallas_call(
        functools.partial(_spatial_sum_kernel, HW, thw),
        out_shape=jax.ShapeDtypeStruct((BC, n_split * _LANE), jnp.float32),
        grid=(n_split, n_steps),
        in_specs=[pl.BlockSpec((BC, thw), lambda s, t: (0, s * n_steps + t))],
        out_specs=pl.BlockSpec((BC, _LANE), lambda s, t: (0, s)),
        compiler_params=pltpu.CompilerParams(
            dimension_semantics=("parallel", "arbitrary"),
            vmem_limit_bytes=vmem_limit),
        cost_estimate=cost,
    )(x2)

    # Tiny (BC x n_split) array of raw sums: lane 0 of each split's 128-lane
    # block, reshaped to [n_split, B, C] for the epilogue kernel.
    partials = stream_out.reshape(BC, n_split, _LANE)[:, :, 0]       # [BC, n_split]
    partials = jnp.transpose(partials, (1, 0)).reshape(n_split, B, C)

    # ---- kernel 2: grid-less epilogue (everything VMEM-resident) ----
    v01 = pl.pallas_call(
        functools.partial(_selector_epilogue_kernel, 1.0 / HW, eps),
        out_shape=jax.ShapeDtypeStruct((B, 2), jnp.float32),
    )(partials, params["w1"], params["b1"], params["gamma"], params["beta"], wh, bh)

    return v01[:, 0].reshape(B, 1, 1, 1), v01[:, 1].reshape(B, 1, 1, 1)


# --------------------------------------------------------------------------
# Pure-JAX reference + synthetic params for validation.
# --------------------------------------------------------------------------
def _reference_forward(x, params, out_channels, eps=1e-5):
    del out_channels
    B, C, H, W = x.shape
    vec = x.astype(jnp.float32).reshape(B, C, H * W).mean(-1)
    o1 = vec @ params["w1"] + params["b1"]
    mu = o1.mean(0, keepdims=True)
    var = ((o1 - mu) ** 2).mean(0, keepdims=True)
    o1 = (o1 - mu) / jnp.sqrt(var + eps) * params["gamma"] + params["beta"]
    o1 = jnp.maximum(o1, 0.0)
    a = o1 @ params["wa"] + params["ba"]
    b = o1 @ params["wb"] + params["bb"]
    v = jax.nn.softmax(jnp.concatenate([a, b], axis=1), axis=1)
    return (v[:, 0].reshape(B, 1, 1, 1), v[:, 1].reshape(B, 1, 1, 1))


def init_params(key, in_channels, intermediate_channels, out_channels):
    """Deterministic synthetic parameter init (shapes match nn.Linear / BatchNorm1d),
    stored as [in_features, out_features] so kernels compute x @ W + b."""
    ks = jax.random.split(key, 8)

    def lin(kw, kb, fan_in, fan_out):
        bound = 1.0 / jnp.sqrt(fan_in)
        w = jax.random.uniform(kw, (fan_in, fan_out), jnp.float32, -bound, bound)
        b = jax.random.uniform(kb, (1, fan_out), jnp.float32, -bound, bound)
        return w, b

    w1, b1 = lin(ks[0], ks[1], in_channels, intermediate_channels)
    wa, ba = lin(ks[2], ks[3], intermediate_channels, out_channels)
    wb, bb = lin(ks[4], ks[5], intermediate_channels, out_channels)
    gamma = 1.0 + 0.1 * jax.random.normal(ks[6], (1, intermediate_channels), jnp.float32)
    beta = 0.1 * jax.random.normal(ks[7], (1, intermediate_channels), jnp.float32)
    return {"w1": w1, "b1": b1, "gamma": gamma, "beta": beta,
            "wa": wa, "ba": ba, "wb": wb, "bb": bb}


if __name__ == "__main__":
    key = jax.random.PRNGKey(0)
    k_p, k1, k2, k3, k4 = jax.random.split(key, 5)

    B, C = 2, 4
    intermediate_channels, out_channels = 32, 1
    params = init_params(k_p, C, intermediate_channels, out_channels)

    cases = [
        (k1, (B, C, 16, 16), None),   # single tile, grid (1, 1)
        (k2, (B, C, 16, 10), 4096),   # HW=160: 2 tiles -> 2-way split, masked tail
        (k3, (B, C, 16, 28), 4096),   # HW=448: 4 tiles -> 2-way split, 2 steps, tail
        (k4, (B, C, 16, 20), 4096),   # HW=320: 3 tiles (odd) -> single-split fallback
    ]
    for kx, shape, tile_bytes in cases:
        x = jax.random.normal(kx, shape, jnp.float32)
        a, b = size_selector_forward(x, params, out_channels,
                                     target_tile_bytes=tile_bytes)
        a = jax.block_until_ready(a)
        b = jax.block_until_ready(b)
        a_ref, b_ref = _reference_forward(x, params, out_channels)
        assert a.shape == (shape[0], 1, 1, 1) and b.shape == (shape[0], 1, 1, 1)
        assert jnp.allclose(a, a_ref, atol=1e-5, rtol=1e-5)
        assert jnp.allclose(b, b_ref, atol=1e-5, rtol=1e-5)

    print("KERNEL_OK")
</pallas_src>

<mosaic_0001>
module attributes {stable_mosaic.version = 11 : i64} {
  func.func @_spatial_sum_kernel(%arg0: i32, %arg1: i32, %arg2: memref<8x256xf32, #tpu.memory_space<vmem>>, %arg3: memref<8x128xf32, #tpu.memory_space<vmem>>) attributes {dimension_semantics = [#tpu.dimension_semantics<parallel>, #tpu.dimension_semantics<arbitrary>], iteration_bounds = array<i64: 1, 1>, scalar_prefetch = 0 : i64, scratch_operands = 0 : i64, tpu.core_type = #tpu.core_type<tc>, window_params = [{transform_indices = @transform_0, window_bounds = array<i64: 8, 256>}, {transform_indices = @transform_1, window_bounds = array<i64: 8, 128>}]} {
    %c0_i32 = arith.constant 0 : i32
    %0 = arith.cmpi eq, %arg1, %c0_i32 : i32
    %1 = arith.extui %0 : i1 to i32
    %c0_i32_0 = arith.constant 0 : i32
    %2 = arith.cmpi ne, %1, %c0_i32_0 : i32
    scf.if %2 {
      %cst_6 = arith.constant 0.000000e+00 : f32
      %10 = vector.broadcast %cst_6 : f32 to vector<8x128xf32>
      %c0_7 = arith.constant 0 : index
      %c0_8 = arith.constant 0 : index
      %11 = vector.load %arg3[%c0_7, %c0_8] : memref<8x128xf32, #tpu.memory_space<vmem>>, vector<8x128xf32>
      tpu.vector_store %arg3[%c0_7, %c0_8], %10 {strides = array<i32>} : memref<8x128xf32, #tpu.memory_space<vmem>>, vector<8x128xf32>,
    } else {
    }
    %c0 = arith.constant 0 : index
    %c0_1 = arith.constant 0 : index
    %3 = vector.load %arg2[%c0, %c0_1] : memref<8x256xf32, #tpu.memory_space<vmem>>, vector<8x256xf32>
    %c0_2 = arith.constant 0 : index
    %c0_3 = arith.constant 0 : index
    %4 = vector.load %arg3[%c0_2, %c0_3] : memref<8x128xf32, #tpu.memory_space<vmem>>, vector<8x128xf32>
    %cst = arith.constant dense<0.000000e+00> : vector<8xf32>
    %5 = vector.multi_reduction <add>, %3, %cst [1] : vector<8x256xf32> to vector<8xf32>
    %6 = vector.shape_cast %5 : vector<8xf32> to vector<8x1xf32>
    %7 = vector.broadcast %6 : vector<8x1xf32> to vector<8x128xf32>
    %8 = arith.addf %4, %7 : vector<8x128xf32>
    %c0_4 = arith.constant 0 : index
    %c0_5 = arith.constant 0 : index
    %9 = vector.load %arg3[%c0_4, %c0_5] : memref<8x128xf32, #tpu.memory_space<vmem>>, vector<8x128xf32>
    tpu.vector_store %arg3[%c0_4, %c0_5], %8 {strides = array<i32>} : memref<8x128xf32, #tpu.memory_space<vmem>>, vector<8x128xf32>,
    return
  }
  func.func @transform_0(%arg0: i32, %arg1: i32) -> (i32, i32) {
    %c1_i32 = arith.constant 1 : i32
    %0 = arith.muli %arg0, %c1_i32 : i32
    %1 = arith.addi %0, %arg1 : i32
    %c0_i32 = arith.constant 0 : i32
    %c0_i32_0 = arith.constant 0 : i32
    return %c0_i32, %1 : i32, i32
  }
  func.func @transform_1(%arg0: i32, %arg1: i32) -> (i32, i32) {
    %c0_i32 = arith.constant 0 : i32
    %c0_i32_0 = arith.constant 0 : i32
    return %c0_i32, %arg0 : i32, i32
  }
}

</mosaic_0001>

<llo_original>
// kernel: tpu_custom_call.1
$region0: #{tpu_custom_call.1}
  #allocation0 [shape = 'u32[]', space=smem, size = 0x4, offset = 0x4, fixed_abs, tag = 'smem constant byte address 0x4 - core index']
  #allocation1 [shape = 'u32[144,128]{1,0:T(1,128)}', space=vmem, size = 0x12000, scoped, tag = 'internal scratch']
  %s0 = inlined_call_operand.hbm [shape: f32[8,256], index: 0, kind: input, shape index: {}]
  %s1 = inlined_call_operand.hbm [shape: f32[8,128], index: 1, kind: output, shape index: {}]
  %s2 = sld [smem:[#allocation0]]
  $region22: #{tpu_custom_call.1} parent=0
    _
  %s4 = ssub.s32 1, %s2
  %s5 = scalar_select 0, %s4, %s2
  $region1: #{tpu_custom_call.1} parent=0
    #allocation2 [shape = 'u8[8192]{0}', space=vmem, size = 0x2000, scoped, tag = 'input window, operand 0, single buffered']
    #allocation3 [shape = 's32[1]{0}', space=sflag, size = 0x4, scoped, tag = 'scoped memory for tpu_custom_call.1']
    #allocation4 [shape = 's32[1]{0}', space=sflag, size = 0x4, scoped, tag = 'scoped memory for tpu_custom_call.1']
    #allocation5 [shape = 'u8[4096]{0}', space=vmem, size = 0x1000, scoped, tag = 'output window, operand 0, single buffered']
    %6 = vsyncpa [#allocation3], 0
    %7 = vsyncpa [#allocation4], 0
    // Predicated region
    $region2: #{tpu_custom_call.1} parent=1 // pred_check
      _
    $region3: #{tpu_custom_call.1} parent=1 // pred_check_branch
      %9 = sbr.rel (0) target = $region5
    $region4: #{tpu_custom_call.1} parent=1 // pred_region
      %s10 = sadd.s32 0, 0
      %s11 = smul.u32 2, %s10
      %s13 = ssub.s32 256, 256
      %14 = vsyncadd [#allocation3], %s13
      %s15 = smul.addr %s11, 128
      %s16 = scalar_lea.hbm %s0, %s15
      %s18 = sshll.u32 [#allocation2], 4
      %s19 = int_to_ptr.vmem [resolvable:$true] %s18
      %21 = dma.hbm_to_vmem [thread:$0]  %s16, 256, %s19, [#allocation3]
    $region5: #{tpu_custom_call.1} parent=1 // pred_fallthru
      _
    // Predicated region
    $region6: #{tpu_custom_call.1} parent=1 // pred_check
      _
    $region7: #{tpu_custom_call.1} parent=1 // pred_check_branch
      %23 = sbr.rel (0) target = $region9
    $region8: #{tpu_custom_call.1} parent=1 // pred_region
      %24 = dma.done [#allocation3], 256
    $region9: #{tpu_custom_call.1} parent=1 // pred_fallthru
      _
    %s25 = sadd.s32 0, 0
    %s26 = smul.u32 2, %s25
    %p27 = scmp.eq.s32.totalorder 0, 0
    // Predicated region
    $region10: #{tpu_custom_call.1} parent=1 // pred_check
      %p28 = pneg %p27
    $region11: #{tpu_custom_call.1} parent=1 // pred_check_branch
      %30 = sbr.rel (%p28) target = $region13
    $region12: #{tpu_custom_call.1} parent=1 // pred_region
      %31 = vst [vmem:[#allocation5] sm:$0xff] 0.0
    $region13: #{tpu_custom_call.1} parent=1 // pred_fallthru
      _
    %v32 = vld [vmem:[#allocation2] sm:$0xff]
    %v33 = vld [vmem:[#allocation2 + $0x8] sm:$0xff]
    %v34 = vld [vmem:[#allocation5] sm:$0xff]
    %v35 = vadd.f32 %v32, %v33
    %36 = vadd.xlane.f32.xlu0 %v35
    %v37 = vpop.xlane.xlu0 %36
    %v38 = vadd.f32 %v34, %v37
    %39 = vst [vmem:[#allocation5] sm:$0xff] %v38
    // Predicated region
    $region14: #{tpu_custom_call.1} parent=1 // pred_check
      _
    $region15: #{tpu_custom_call.1} parent=1 // pred_check_branch
      %41 = sbr.rel (0) target = $region17
    $region16: #{tpu_custom_call.1} parent=1 // pred_region
      %s43 = ssub.s32 128, 128
      %44 = vsyncadd [#allocation4], %s43
      %s46 = sshll.u32 [#allocation5], 4
      %s47 = int_to_ptr.vmem [resolvable:$true] %s46
      %49 = dma.vmem_to_hbm [thread:$0]  %s47, 128, %s1, [#allocation4]
    $region17: #{tpu_custom_call.1} parent=1 // pred_fallthru
      _
    // Predicated region
    $region18: #{tpu_custom_call.1} parent=1 // pred_check
      _
    $region19: #{tpu_custom_call.1} parent=1 // pred_check_branch
      %51 = sbr.rel (0) target = $region21
    $region20: #{tpu_custom_call.1} parent=1 // pred_region
      %52 = dma.done [#allocation4], 128
    $region21: #{tpu_custom_call.1} parent=1 // pred_fallthru
      _
    %53 = vsyncpa [#allocation3], 1
    %54 = vsyncpa [#allocation4], 1

</llo_original>
